<compile_context>
chip_gen: v5e
topology: v5e:2x2
jax: 0.10.0
libtpu: 0.0.40
codegen_flags: <defaults>
</compile_context>

<pallas_src>
import functools

import jax
import jax.numpy as jnp
from jax.experimental import pallas as pl
from jax.experimental.pallas import tpu as pltpu


_VMEM_LIMIT_BYTES = 64 * 1024 * 1024   # <= v7x physical VMEM per TensorCore


def _round_up(x: int, m: int) -> int:
    return (x + m - 1) // m * m


# ------------------------- Pallas kernel (hot path) -------------------------

def fused_mlp_kernel(*refs, n_linear: int):
    """refs = (x_ref, w1_ref, b1_ref, ..., wN_ref, bN_ref, o_ref).

    x_ref : (tb, Din_pad)            f32
    wi_ref: (Dprev_pad, Dnext_pad)   f32 or bf16, already transposed to (in,out)
    bi_ref: (1, Dnext_pad)           f32
    o_ref : (tb, Dout_pad)           f32
    All feature dims are padded to multiples of 128 -> lane-dense loads/stores.
    The whole MLP runs in one kernel body; intermediates never touch HBM.
    """
    x_ref = refs[0]
    o_ref = refs[-1]
    wb_refs = refs[1:-1]

    h = x_ref[...]
    for li in range(n_linear):
        w = wb_refs[2 * li][...]
        b = wb_refs[2 * li + 1][...]            # (1, Dnext_pad), broadcasts
        h = jnp.dot(h.astype(w.dtype), w,
                    preferred_element_type=jnp.float32) + b
        if li < n_linear - 1:                   # ReLU after every layer but last
            h = jnp.maximum(h, 0.0)
    o_ref[...] = h.astype(o_ref.dtype)


# ------------------------------ jitted wrapper -------------------------------

@functools.partial(jax.jit, static_argnames=("out_height", "single_buffer_weights"))
def fused_mlp_forward(x, flat_wb, *, out_height, single_buffer_weights=True):
    """x: (B, Din). flat_wb: (W1_T_pad, b1_pad, W2_T_pad, b2_pad, ...)."""
    n_linear = len(flat_wb) // 2
    B, Din = x.shape
    Din_pad = flat_wb[0].shape[0]
    Dout_pad = flat_wb[-2].shape[1]

    # Batch tiling: >=2 "parallel" grid steps whenever possible (v7x megacore),
    # tiles capped at 1024 rows (amortize per-step pipeline overhead, v5e/v6e).
    B_pad = _round_up(B, 8)
    if B_pad <= 8:
        tb = B_pad                                  # tiny batch: single step
    else:
        tb = min(_round_up((B_pad + 1) // 2, 8), 1024)
        B_pad = _round_up(B_pad, tb)

    # Only pad x when actually needed (skips an extra HBM pass when aligned).
    if B_pad == B and Din_pad == Din:
        x_p = x
    else:
        x_p = jnp.zeros((B_pad, Din_pad), x.dtype).at[:B, :Din].set(x)

    # VMEM budget check for the fully-resident-weight design.
    wt_bufs = 1 if single_buffer_weights else 2
    weight_bytes = sum(int(a.size) * a.dtype.itemsize for a in flat_wb) * wt_bufs
    widest = max([Din_pad, Dout_pad] + [int(w.shape[1]) for w in flat_wb[0::2]])
    act_bytes = (2 * tb * (Din_pad + Dout_pad) * x.dtype.itemsize   # dbl-buffered I/O tiles
                 + 2 * tb * widest * 4)                              # live intermediates
    if weight_bytes + act_bytes > _VMEM_LIMIT_BYTES:
        # TODO(synk): add a K/N-tiled variant (reduction grid axis + f32
        # accumulator scratch + pl.when init/finalize) for huge hidden sizes.
        raise ValueError("MLP too large for fully VMEM-resident fused kernel; "
                         "needs the tiled-weight fallback.")

    weight_mode = pl.Buffered(buffer_count=1) if single_buffer_weights else None

    in_specs = [pl.BlockSpec((tb, Din_pad), lambda i: (i, 0))]   # activation tile
    for a in flat_wb:                                            # resident weights/biases
        if weight_mode is not None:
            in_specs.append(pl.BlockSpec(a.shape, lambda i: (0, 0),
                                         pipeline_mode=weight_mode))
        else:
            in_specs.append(pl.BlockSpec(a.shape, lambda i: (0, 0)))

    kernel = functools.partial(fused_mlp_kernel, n_linear=n_linear)

    out_padded = pl.pallas_call(
        kernel,
        out_shape=jax.ShapeDtypeStruct((B_pad, Dout_pad), x.dtype),
        grid=(B_pad // tb,),
        in_specs=in_specs,
        out_specs=pl.BlockSpec((tb, Dout_pad), lambda i: (i, 0)),
        compiler_params=pltpu.CompilerParams(
            dimension_semantics=("parallel",),
            vmem_limit_bytes=_VMEM_LIMIT_BYTES),
    )(x_p, *flat_wb)

    if B_pad == B and out_height == Dout_pad:
        return out_padded                       # padded-tolerant consumers: no slice
    return out_padded[:B, :out_height]          # fused into the jitted program


# ------------------------- Model definition (glue) --------------------------

class ModelParams:
    def __init__(self, in_layer_height, in_bitwidth, out_height, hidden_height,
                 hidden_bitwidth, model_layers, activation="RELU",
                 dropout_rate=0.0):
        self.in_layer_height = in_layer_height
        self.in_bitwidth = in_bitwidth
        self.out_height = out_height
        self.hidden_height = hidden_height
        self.hidden_bitwidth = hidden_bitwidth
        self.model_layers = model_layers
        self.activation = activation
        self.dropout_rate = dropout_rate


class MLPPallas:
    """JAX/Pallas port of the PyTorch MLP forward pass (single fused kernel)."""

    # Flipped to False (once, process-wide) if pl.Buffered(1) is rejected by
    # the installed Pallas version -> fall back to default double buffering.
    _single_buffer_ok = True

    def __init__(self, params: ModelParams, key, weight_dtype=jnp.float32):
        if params.model_layers < 2:
            raise Exception("Model must have at least 2 layers")
        self.p = params
        self.weight_dtype = weight_dtype
        hidden_layers_count = max(0, params.model_layers - 2)
        layer_heights = ([params.in_layer_height]
                         + [params.hidden_height] * hidden_layers_count
                         + [params.out_height])

        # nn.Linear default init: U(-1/sqrt(fan_in), 1/sqrt(fan_in)) for W and b.
        self.ref_layers = []      # unpadded f32 (W_T (in,out), b (out,)) for reference
        padded = []
        n_linear = params.model_layers - 1
        for li in range(n_linear):
            fan_in = layer_heights[li]
            fan_out = layer_heights[li + 1]
            key, kw, kb = jax.random.split(key, 3)
            bound = 1.0 / jnp.sqrt(fan_in)
            w = jax.random.uniform(kw, (fan_out, fan_in), jnp.float32,
                                   minval=-bound, maxval=bound)
            b = jax.random.uniform(kb, (fan_out,), jnp.float32,
                                   minval=-bound, maxval=bound)
            w_t = w.T                                         # (in, out)
            self.ref_layers.append((w_t, b))

            in_pad = _round_up(fan_in, 128)
            out_pad = _round_up(fan_out, 128)
            w_t_pad = (jnp.zeros((in_pad, out_pad), weight_dtype)
                       .at[:fan_in, :fan_out].set(w_t.astype(weight_dtype)))
            b_pad = jnp.zeros((1, out_pad), jnp.float32).at[0, :fan_out].set(b)
            padded.append(w_t_pad)
            padded.append(b_pad)
        self._flat_wb = tuple(padded)

    def forward(self, x):
        cls = MLPPallas
        if cls._single_buffer_ok:
            try:
                return fused_mlp_forward(x, self._flat_wb,
                                         out_height=self.p.out_height,
                                         single_buffer_weights=True)
            except Exception:
                cls._single_buffer_ok = False   # retry with default buffering
        return fused_mlp_forward(x, self._flat_wb,
                                 out_height=self.p.out_height,
                                 single_buffer_weights=False)


def forward_ref(model: MLPPallas, x):
    """Pure-JAX reference mirroring the kernel's math (incl. optional bf16 cast)."""
    n_linear = len(model.ref_layers)
    h = x
    for li, (w_t, b) in enumerate(model.ref_layers):
        h = jnp.dot(h.astype(model.weight_dtype), w_t.astype(model.weight_dtype),
                    preferred_element_type=jnp.float32) + b
        if li < n_linear - 1:
            h = jnp.maximum(h, 0.0)
    return h


# --------------------------------- Driver -----------------------------------

if __name__ == "__main__":
    key = jax.random.PRNGKey(0)

    # Case 1: 3 layers -> Linear(32,64) -> ReLU -> Linear(64,16), f32 weights,
    # aligned batch of 16 -> 2 "parallel" grid steps (v7x megacore).
    params = ModelParams(
        in_layer_height=32, in_bitwidth=32, out_height=16, hidden_height=64,
        hidden_bitwidth=32, model_layers=3, activation="RELU", dropout_rate=0.0)
    key, kx, kp = jax.random.split(key, 3)
    x = jax.random.normal(kx, (16, params.in_layer_height), jnp.float32)
    model = MLPPallas(params, kp)
    out = jax.block_until_ready(model.forward(x))
    ref = forward_ref(model, x)
    assert out.shape == (16, params.out_height)
    assert jnp.allclose(out, ref, atol=1e-5, rtol=1e-5)

    # Case 2: 4 layers (multi-hidden-layer fused path), ragged batch of 5.
    params2 = ModelParams(
        in_layer_height=24, in_bitwidth=32, out_height=10, hidden_height=48,
        hidden_bitwidth=32, model_layers=4, activation="RELU", dropout_rate=0.0)
    key, kx2, kp2 = jax.random.split(key, 3)
    x2 = jax.random.normal(kx2, (5, params2.in_layer_height), jnp.float32)
    model2 = MLPPallas(params2, kp2)
    out2 = jax.block_until_ready(model2.forward(x2))
    ref2 = forward_ref(model2, x2)
    assert out2.shape == (5, params2.out_height)
    assert jnp.allclose(out2, ref2, atol=1e-5, rtol=1e-5)

    # Case 3: bf16 weights (v6e/v7x MXU fast path), f32 accumulation;
    # compared against a matching bf16-cast reference with a looser tolerance.
    params3 = ModelParams(
        in_layer_height=32, in_bitwidth=32, out_height=16, hidden_height=64,
        hidden_bitwidth=32, model_layers=3, activation="RELU", dropout_rate=0.0)
    key, kx3, kp3 = jax.random.split(key, 3)
    x3 = jax.random.normal(kx3, (16, params3.in_layer_height), jnp.float32)
    model3 = MLPPallas(params3, kp3, weight_dtype=jnp.bfloat16)
    out3 = jax.block_until_ready(model3.forward(x3))
    ref3 = forward_ref(model3, x3)
    assert out3.shape == (16, params3.out_height)
    assert jnp.allclose(out3, ref3, atol=1e-2, rtol=1e-2)

    print("KERNEL_OK")
</pallas_src>

<mosaic_0001>
module attributes {stable_mosaic.version = 11 : i64} {
  func.func @fused_mlp_kernel(%arg0: i32, %arg1: memref<8x128xf32, #tpu.memory_space<vmem>>, %arg2: memref<128x128xf32, #tpu.memory_space<vmem>>, %arg3: memref<1x128xf32, #tpu.memory_space<vmem>>, %arg4: memref<128x128xf32, #tpu.memory_space<vmem>>, %arg5: memref<1x128xf32, #tpu.memory_space<vmem>>, %arg6: memref<8x128xf32, #tpu.memory_space<vmem>>) attributes {dimension_semantics = [#tpu.dimension_semantics<parallel>], iteration_bounds = array<i64: 2>, scalar_prefetch = 0 : i64, scratch_operands = 0 : i64, tpu.core_type = #tpu.core_type<tc>, window_params = [{transform_indices = @transform_0, window_bounds = array<i64: 8, 128>}, {pipeline_mode = #tpu.pipeline_mode<synchronous>, transform_indices = @transform_1, window_bounds = array<i64: 128, 128>}, {pipeline_mode = #tpu.pipeline_mode<synchronous>, transform_indices = @transform_2, window_bounds = array<i64: 1, 128>}, {pipeline_mode = #tpu.pipeline_mode<synchronous>, transform_indices = @transform_3, window_bounds = array<i64: 128, 128>}, {pipeline_mode = #tpu.pipeline_mode<synchronous>, transform_indices = @transform_4, window_bounds = array<i64: 1, 128>}, {transform_indices = @transform_5, window_bounds = array<i64: 8, 128>}]} {
    %c0 = arith.constant 0 : index
    %c0_0 = arith.constant 0 : index
    %0 = vector.load %arg1[%c0, %c0_0] : memref<8x128xf32, #tpu.memory_space<vmem>>, vector<8x128xf32>
    %c0_1 = arith.constant 0 : index
    %c0_2 = arith.constant 0 : index
    %1 = vector.load %arg2[%c0_1, %c0_2] : memref<128x128xf32, #tpu.memory_space<vmem>>, vector<128x128xf32>
    %c0_3 = arith.constant 0 : index
    %c0_4 = arith.constant 0 : index
    %2 = vector.load %arg3[%c0_3, %c0_4] : memref<1x128xf32, #tpu.memory_space<vmem>>, vector<1x128xf32>
    %cst = arith.constant dense<0.000000e+00> : vector<8x128xf32>
    %3 = tpu.matmul %0, %1, %cst {dimension_numbers = #tpu.dot_dimension_numbers<[1], [0], [0], [1], [0, 0, 1, 1], [], []>} : vector<8x128xf32>, vector<128x128xf32>, vector<8x128xf32> -> vector<8x128xf32>
    %4 = vector.broadcast %2 : vector<1x128xf32> to vector<8x128xf32>
    %5 = arith.addf %3, %4 : vector<8x128xf32>
    %cst_5 = arith.constant 0.000000e+00 : f32
    %6 = vector.broadcast %cst_5 : f32 to vector<8x128xf32>
    %7 = arith.maximumf %5, %6 : vector<8x128xf32>
    %c0_6 = arith.constant 0 : index
    %c0_7 = arith.constant 0 : index
    %8 = vector.load %arg4[%c0_6, %c0_7] : memref<128x128xf32, #tpu.memory_space<vmem>>, vector<128x128xf32>
    %c0_8 = arith.constant 0 : index
    %c0_9 = arith.constant 0 : index
    %9 = vector.load %arg5[%c0_8, %c0_9] : memref<1x128xf32, #tpu.memory_space<vmem>>, vector<1x128xf32>
    %cst_10 = arith.constant dense<0.000000e+00> : vector<8x128xf32>
    %10 = tpu.matmul %7, %8, %cst_10 {dimension_numbers = #tpu.dot_dimension_numbers<[1], [0], [0], [1], [0, 0, 1, 1], [], []>} : vector<8x128xf32>, vector<128x128xf32>, vector<8x128xf32> -> vector<8x128xf32>
    %11 = vector.broadcast %9 : vector<1x128xf32> to vector<8x128xf32>
    %12 = arith.addf %10, %11 : vector<8x128xf32>
    %c0_11 = arith.constant 0 : index
    %c0_12 = arith.constant 0 : index
    %13 = vector.load %arg6[%c0_11, %c0_12] : memref<8x128xf32, #tpu.memory_space<vmem>>, vector<8x128xf32>
    tpu.vector_store %arg6[%c0_11, %c0_12], %12 {strides = array<i32>} : memref<8x128xf32, #tpu.memory_space<vmem>>, vector<8x128xf32>,
    return
  }
  func.func @transform_0(%arg0: i32) -> (i32, i32) {
    %c0_i32 = arith.constant 0 : i32
    %c0_i32_0 = arith.constant 0 : i32
    return %arg0, %c0_i32 : i32, i32
  }
  func.func @transform_1(%arg0: i32) -> (i32, i32) {
    %c0_i32 = arith.constant 0 : i32
    %c0_i32_0 = arith.constant 0 : i32
    %c0_i32_1 = arith.constant 0 : i32
    return %c0_i32, %c0_i32_0 : i32, i32
  }
  func.func @transform_2(%arg0: i32) -> (i32, i32) {
    %c0_i32 = arith.constant 0 : i32
    %c0_i32_0 = arith.constant 0 : i32
    %c0_i32_1 = arith.constant 0 : i32
    return %c0_i32, %c0_i32_0 : i32, i32
  }
  func.func @transform_3(%arg0: i32) -> (i32, i32) {
    %c0_i32 = arith.constant 0 : i32
    %c0_i32_0 = arith.constant 0 : i32
    %c0_i32_1 = arith.constant 0 : i32
    return %c0_i32, %c0_i32_0 : i32, i32
  }
  func.func @transform_4(%arg0: i32) -> (i32, i32) {
    %c0_i32 = arith.constant 0 : i32
    %c0_i32_0 = arith.constant 0 : i32
    %c0_i32_1 = arith.constant 0 : i32
    return %c0_i32, %c0_i32_0 : i32, i32
  }
  func.func @transform_5(%arg0: i32) -> (i32, i32) {
    %c0_i32 = arith.constant 0 : i32
    %c0_i32_0 = arith.constant 0 : i32
    return %arg0, %c0_i32 : i32, i32
  }
}

module attributes {stable_mosaic.version = 11 : i64} {
  func.func @fused_mlp_kernel(%arg0: i32, %arg1: memref<8x128xf32, #tpu.memory_space<vmem>>, %arg2: memref<128x128xf32, #tpu.memory_space<vmem>>, %arg3: memref<1x128xf32, #tpu.memory_space<vmem>>, %arg4: memref<128x128xf32, #tpu.memory_space<vmem>>, %arg5: memref<1x128xf32, #tpu.memory_space<vmem>>, %arg6: memref<8x128xf32, #tpu.memory_space<vmem>>) attributes {dimension_semantics = [#tpu.dimension_semantics<parallel>], iteration_bounds = array<i64: 2>, scalar_prefetch = 0 : i64, scratch_operands = 0 : i64, tpu.core_type = #tpu.core_type<tc>, window_params = [{transform_indices = @transform_0, window_bounds = array<i64: 8, 128>}, {pipeline_mode = #tpu.pipeline_mode<synchronous>, transform_indices = @transform_1, window_bounds = array<i64: 128, 128>}, {pipeline_mode = #tpu.pipeline_mode<synchronous>, transform_indices = @transform_2, window_bounds = array<i64: 1, 128>}, {pipeline_mode = #tpu.pipeline_mode<synchronous>, transform_indices = @transform_3, window_bounds = array<i64: 128, 128>}, {pipeline_mode = #tpu.pipeline_mode<synchronous>, transform_indices = @transform_4, window_bounds = array<i64: 1, 128>}, {transform_indices = @transform_5, window_bounds = array<i64: 8, 128>}]} {
    %c0 = arith.constant 0 : index
    %c0_0 = arith.constant 0 : index
    %0 = vector.load %arg1[%c0, %c0_0] : memref<8x128xf32, #tpu.memory_space<vmem>>, vector<8x128xf32>
    %c0_1 = arith.constant 0 : index
    %c0_2 = arith.constant 0 : index
    %1 = vector.load %arg2[%c0_1, %c0_2] : memref<128x128xf32, #tpu.memory_space<vmem>>, vector<128x128xf32>
    %c0_3 = arith.constant 0 : index
    %c0_4 = arith.constant 0 : index
    %2 = vector.load %arg3[%c0_3, %c0_4] : memref<1x128xf32, #tpu.memory_space<vmem>>, vector<1x128xf32>
    %cst = arith.constant dense<0.000000e+00> : vector<8x128xf32>
    %3 = tpu.matmul %0, %1, %cst {dimension_numbers = #tpu.dot_dimension_numbers<[1], [0], [0], [1], [0, 0, 1, 1], [], []>} : vector<8x128xf32>, vector<128x128xf32>, vector<8x128xf32> -> vector<8x128xf32>
    %4 = vector.broadcast %2 : vector<1x128xf32> to vector<8x128xf32>
    %5 = arith.addf %3, %4 : vector<8x128xf32>
    %cst_5 = arith.constant 0.000000e+00 : f32
    %6 = vector.broadcast %cst_5 : f32 to vector<8x128xf32>
    %7 = arith.maximumf %5, %6 : vector<8x128xf32>
    %c0_6 = arith.constant 0 : index
    %c0_7 = arith.constant 0 : index
    %8 = vector.load %arg4[%c0_6, %c0_7] : memref<128x128xf32, #tpu.memory_space<vmem>>, vector<128x128xf32>
    %c0_8 = arith.constant 0 : index
    %c0_9 = arith.constant 0 : index
    %9 = vector.load %arg5[%c0_8, %c0_9] : memref<1x128xf32, #tpu.memory_space<vmem>>, vector<1x128xf32>
    %cst_10 = arith.constant dense<0.000000e+00> : vector<8x128xf32>
    %10 = tpu.matmul %7, %8, %cst_10 {dimension_numbers = #tpu.dot_dimension_numbers<[1], [0], [0], [1], [0, 0, 1, 1], [], []>} : vector<8x128xf32>, vector<128x128xf32>, vector<8x128xf32> -> vector<8x128xf32>
    %11 = vector.broadcast %9 : vector<1x128xf32> to vector<8x128xf32>
    %12 = arith.addf %10, %11 : vector<8x128xf32>
    %c0_11 = arith.constant 0 : index
    %c0_12 = arith.constant 0 : index
    %13 = vector.load %arg6[%c0_11, %c0_12] : memref<8x128xf32, #tpu.memory_space<vmem>>, vector<8x128xf32>
    tpu.vector_store %arg6[%c0_11, %c0_12], %12 {strides = array<i32>} : memref<8x128xf32, #tpu.memory_space<vmem>>, vector<8x128xf32>,
    return
  }
  func.func @transform_0(%arg0: i32) -> (i32, i32) {
    %c0_i32 = arith.constant 0 : i32
    %c0_i32_0 = arith.constant 0 : i32
    return %arg0, %c0_i32 : i32, i32
  }
  func.func @transform_1(%arg0: i32) -> (i32, i32) {
    %c0_i32 = arith.constant 0 : i32
    %c0_i32_0 = arith.constant 0 : i32
    %c0_i32_1 = arith.constant 0 : i32
    return %c0_i32, %c0_i32_0 : i32, i32
  }
  func.func @transform_2(%arg0: i32) -> (i32, i32) {
    %c0_i32 = arith.constant 0 : i32
    %c0_i32_0 = arith.constant 0 : i32
    %c0_i32_1 = arith.constant 0 : i32
    return %c0_i32, %c0_i32_0 : i32, i32
  }
  func.func @transform_3(%arg0: i32) -> (i32, i32) {
    %c0_i32 = arith.constant 0 : i32
    %c0_i32_0 = arith.constant 0 : i32
    %c0_i32_1 = arith.constant 0 : i32
    return %c0_i32, %c0_i32_0 : i32, i32
  }
  func.func @transform_4(%arg0: i32) -> (i32, i32) {
    %c0_i32 = arith.constant 0 : i32
    %c0_i32_0 = arith.constant 0 : i32
    %c0_i32_1 = arith.constant 0 : i32
    return %c0_i32, %c0_i32_0 : i32, i32
  }
  func.func @transform_5(%arg0: i32) -> (i32, i32) {
    %c0_i32 = arith.constant 0 : i32
    %c0_i32_0 = arith.constant 0 : i32
    return %arg0, %c0_i32 : i32, i32
  }
}

</mosaic_0001>

<llo_original>
// kernel: fused_mlp_forward.1
$region0: #{fused_mlp_forward.1}
  #allocation0 [shape = 'u32[]', space=smem, size = 0x4, offset = 0x4, fixed_abs, tag = 'smem constant byte address 0x4 - core index']
  #allocation1 [shape = 'u32[72,128]{1,0:T(1,128)}', space=vmem, size = 0x9000, scoped, tag = 'internal scratch']
  %s0 = inlined_call_operand.vmem [shape: f32[16,128], index: 0, kind: input, shape index: {}]
  %s1 = inlined_call_operand.hbm [shape: f32[128,128], index: 1, kind: input, shape index: {}]
  %s2 = inlined_call_operand.vmem [shape: f32[1,128], index: 2, kind: input, shape index: {}]
  %s3 = inlined_call_operand.hbm [shape: f32[128,128], index: 3, kind: input, shape index: {}]
  %s4 = inlined_call_operand.vmem [shape: f32[1,128], index: 4, kind: input, shape index: {}]
  %s5 = inlined_call_operand.hbm [shape: f32[16,128], index: 5, kind: output, shape index: {}]
  %s6 = sld [smem:[#allocation0]]
  $region61: #{fused_mlp_forward.1} parent=0
    _
  %s8 = ssub.s32 1, %s6
  %s9 = scalar_select 0, %s8, %s6
  $region1: #{fused_mlp_forward.1} parent=0
    #allocation2 [shape = 'u8[65536]{0}', space=vmem, size = 0x10000, scoped, tag = 'input window, operand 1, single buffered']
    #allocation3 [shape = 's32[2]{0}', space=sflag, size = 0x8, scoped, tag = 'scoped memory for fused_mlp_forward.1']
    #allocation4 [shape = 's32[2]{0}', space=sflag, size = 0x8, scoped, tag = 'scoped memory for fused_mlp_forward.1']
    #allocation5 [shape = 'u8[65536]{0}', space=vmem, size = 0x10000, scoped, tag = 'input window, operand 3, single buffered']
    #allocation6 [shape = 's32[1]{0}', space=sflag, size = 0x4, scoped, tag = 'scoped memory for fused_mlp_forward.1']
    #allocation7 [shape = 'u8[8192]{0}', space=vmem, size = 0x2000, scoped, tag = 'output window, operand 0']
    %10 = vsyncpa [#allocation3], 0
    %11 = vsyncpa [#allocation6], 0
    %12 = vsyncpa [#allocation4], 0
    %s13 = scalar_lea.sflag [#allocation4], 1
    %14 = vsyncpa %s13, 0
    loop: start=0, step=1, limit=4
    $region2: #{fused_mlp_forward.1} parent=1 // loop_pre_header
      _
    $region3: #{fused_mlp_forward.1} parent=1 // loop_header
      %s16 = sphi 0, %s20
      %p17 = scmp.ge.s32.totalorder %s16, 4
      %s26 = sphi 0, %s28
      %s29 = sphi 0, %s26
      %s30 = sphi 0, %s29
      %s46 = sphi 0, %s30
      %s50 = sphi 0, %s50
      %s52 = sphi 0, %s50
      %s53 = sphi 0, %s52
      %s67 = sphi 0, %s53
      %s71 = sphi 0, %s71
      %s73 = sphi 0, %s71
      %s74 = sphi 0, %s73
      %s88 = sphi 0, %s74
      %s92 = sphi 0, %s92
      %s94 = sphi 0, %s92
      %s95 = sphi 0, %s94
      %s109 = sphi 0, %s95
      %s113 = sphi 0, %s113
      %s115 = sphi 0, %s113
      %s116 = sphi 0, %s115
      %s130 = sphi 0, %s116
      %s136 = sphi 0, %s138
      %s139 = sphi 0, %s136
      %s140 = sphi 0, %s139
      %s156 = sphi 0, %s140
    $region4: #{fused_mlp_forward.1} parent=1 // loop_header_branch
      %19 = sbr.rel (%p17) target = $region8
    $region5: #{fused_mlp_forward.1} parent=1 // loop_body
      %s21 = ssub.s32 %s16, 1
      %s22 = ssub.s32 %s16, 2
      %s23 = sadd.s32 %s16, 1
      %s24 = ssub.s32 %s16, %s23
      %p25 = scmp.eq.s32.totalorder %s24, 0
      %s27 = sadd.s32 %s26, 1
      %s28 = scalar_select %p25, %s26, %s27
      %p31 = pneg %p25
      %p32 = scmp.eq.s32.totalorder %s16, 1
      %p33 = por %p31, %p32
      %p34 = scmp.ne.s32.totalorder %s26, %s29
      %p35 = scmp.eq.s32.totalorder %s16, 0
      %p36 = por %p34, %p35
      %p37 = scmp.ne.s32.totalorder %s26, %s29
      %p38 = scmp.eq.s32.totalorder %s21, 1
      %p39 = por %p37, %p38
      %p40 = scmp.ne.s32.totalorder %s29, %s30
      %p41 = scmp.eq.s32.totalorder %s21, 0
      %p42 = por %p40, %p41
      %p43 = scmp.ne.s32.totalorder %s29, %s30
      %p44 = scmp.eq.s32.totalorder %s22, 1
      %p45 = por %p43, %p44
      %p47 = scmp.ne.s32.totalorder %s30, %s46
      %p48 = scmp.eq.s32.totalorder %s22, 0
      %p49 = por %p47, %p48
      %s51 = sadd.s32 %s50, 1
      %p54 = scmp.eq.s32.totalorder %s16, 1
      %p55 = scmp.ne.s32.totalorder %s50, %s52
      %p56 = scmp.eq.s32.totalorder %s16, 0
      %p57 = por %p55, %p56
      %p58 = scmp.ne.s32.totalorder %s50, %s52
      %p59 = scmp.eq.s32.totalorder %s21, 1
      %p60 = por %p58, %p59
      %p61 = scmp.ne.s32.totalorder %s52, %s53
      %p62 = scmp.eq.s32.totalorder %s21, 0
      %p63 = por %p61, %p62
      %p64 = scmp.ne.s32.totalorder %s52, %s53
      %p65 = scmp.eq.s32.totalorder %s22, 1
      %p66 = por %p64, %p65
      %p68 = scmp.ne.s32.totalorder %s53, %s67
      %p69 = scmp.eq.s32.totalorder %s22, 0
      %p70 = por %p68, %p69
      %s72 = sadd.s32 %s71, 1
      %p75 = scmp.eq.s32.totalorder %s16, 1
      %p76 = scmp.ne.s32.totalorder %s71, %s73
      %p77 = scmp.eq.s32.totalorder %s16, 0
      %p78 = por %p76, %p77
      %p79 = scmp.ne.s32.totalorder %s71, %s73
      %p80 = scmp.eq.s32.totalorder %s21, 1
      %p81 = por %p79, %p80
      %p82 = scmp.ne.s32.totalorder %s73, %s74
      %p83 = scmp.eq.s32.totalorder %s21, 0
      %p84 = por %p82, %p83
      %p85 = scmp.ne.s32.totalorder %s73, %s74
      %p86 = scmp.eq.s32.totalorder %s22, 1
      %p87 = por %p85, %p86
      %p89 = scmp.ne.s32.totalorder %s74, %s88
      %p90 = scmp.eq.s32.totalorder %s22, 0
      %p91 = por %p89, %p90
      %s93 = sadd.s32 %s92, 1
      %p96 = scmp.eq.s32.totalorder %s16, 1
      %p97 = scmp.ne.s32.totalorder %s92, %s94
      %p98 = scmp.eq.s32.totalorder %s16, 0
      %p99 = por %p97, %p98
      %p100 = scmp.ne.s32.totalorder %s92, %s94
      %p101 = scmp.eq.s32.totalorder %s21, 1
      %p102 = por %p100, %p101
      %p103 = scmp.ne.s32.totalorder %s94, %s95
      %p104 = scmp.eq.s32.totalorder %s21, 0
      %p105 = por %p103, %p104
      %p106 = scmp.ne.s32.totalorder %s94, %s95
      %p107 = scmp.eq.s32.totalorder %s22, 1
      %p108 = por %p106, %p107
      %p110 = scmp.ne.s32.totalorder %s95, %s109
      %p111 = scmp.eq.s32.totalorder %s22, 0
      %p112 = por %p110, %p111
      %s114 = sadd.s32 %s113, 1
      %p117 = scmp.eq.s32.totalorder %s16, 1
      %p118 = scmp.ne.s32.totalorder %s113, %s115
      %p119 = scmp.eq.s32.totalorder %s16, 0
      %p120 = por %p118, %p119
      %p121 = scmp.ne.s32.totalorder %s113, %s115
      %p122 = scmp.eq.s32.totalorder %s21, 1
      %p123 = por %p121, %p122
      %p124 = scmp.ne.s32.totalorder %s115, %s116
      %p125 = scmp.eq.s32.totalorder %s21, 0
      %p126 = por %p124, %p125
      %p127 = scmp.ne.s32.totalorder %s115, %s116
      %p128 = scmp.eq.s32.totalorder %s22, 1
      %p129 = por %p127, %p128
      %p131 = scmp.ne.s32.totalorder %s116, %s130
      %p132 = scmp.eq.s32.totalorder %s22, 0
      %p133 = por %p131, %p132
      %s134 = ssub.s32 %s16, %s23
      %p135 = scmp.eq.s32.totalorder %s134, 0
      %s137 = sadd.s32 %s136, 1
      %s138 = scalar_select %p135, %s136, %s137
      %p141 = pneg %p135
      %p142 = scmp.eq.s32.totalorder %s16, 1
      %p143 = por %p141, %p142
      %p144 = scmp.ne.s32.totalorder %s136, %s139
      %p145 = scmp.eq.s32.totalorder %s16, 0
      %p146 = por %p144, %p145
      %p147 = scmp.ne.s32.totalorder %s136, %s139
      %p148 = scmp.eq.s32.totalorder %s21, 1
      %p149 = por %p147, %p148
      %p150 = scmp.ne.s32.totalorder %s139, %s140
      %p151 = scmp.eq.s32.totalorder %s21, 0
      %p152 = por %p150, %p151
      %p153 = scmp.ne.s32.totalorder %s139, %s140
      %p154 = scmp.eq.s32.totalorder %s22, 1
      %p155 = por %p153, %p154
      %p157 = scmp.ne.s32.totalorder %s140, %s156
      %p158 = scmp.eq.s32.totalorder %s22, 0
      %p159 = por %p157, %p158
      %p160 = scmp.le.s32.totalorder 1, %s16
      %p161 = scmp.lt.s32.totalorder %s16, 3
      %p162 = pnand %p160, %p161
      %p163 = pneg %p162
      // Predicated region
      $region9: #{fused_mlp_forward.1} parent=5 // pred_check
        _
      $region10: #{fused_mlp_forward.1} parent=5 // pred_check_branch
        %165 = sbr.rel (%p162) target = $region12
      $region11: #{fused_mlp_forward.1} parent=5 // pred_region
        %s166 = ssub.s32 %s16, 1
        // Predicated region
        $region13: #{fused_mlp_forward.1} parent=11 // pred_check
          %p167 = pneg %p63
        $region14: #{fused_mlp_forward.1} parent=11 // pred_check_branch
          %169 = sbr.rel (%p167) target = $region16
        $region15: #{fused_mlp_forward.1} parent=11 // pred_region
          %171 = vsyncadd [#allocation3], 0
          %s172 = sshll.u32 %s1, 4
          %s173 = int_to_ptr.hbm [resolvable:$true] %s172
          %s174 = sshll.u32 [#allocation2], 4
          %s175 = int_to_ptr.vmem [resolvable:$true] %s174
          %180 = dma.hbm_to_vmem [thread:$0]  %s173, 2048, %s175, [#allocation3], 128, 128, 8
        $region16: #{fused_mlp_forward.1} parent=11 // pred_fallthru
          _
        // Predicated region
        $region17: #{fused_mlp_forward.1} parent=11 // pred_check
          %p181 = pneg %p84
        $region18: #{fused_mlp_forward.1} parent=11 // pred_check_branch
          %183 = sbr.rel (%p181) target = $region20
        $region19: #{fused_mlp_forward.1} parent=11 // pred_region
          _
        $region20: #{fused_mlp_forward.1} parent=11 // pred_fallthru
          _
        // Predicated region
        $region21: #{fused_mlp_forward.1} parent=11 // pred_check
          %p184 = pneg %p105
        $region22: #{fused_mlp_forward.1} parent=11 // pred_check_branch
          %186 = sbr.rel (%p184) target = $region24
        $region23: #{fused_mlp_forward.1} parent=11 // pred_region
          %188 = vsyncadd [#allocation6], 0
          %s189 = sshll.u32 %s3, 4
          %s190 = int_to_ptr.hbm [resolvable:$true] %s189
          %s191 = sshll.u32 [#allocation5], 4
          %s192 = int_to_ptr.vmem [resolvable:$true] %s191
          %197 = dma.hbm_to_vmem [thread:$0]  %s190, 2048, %s192, [#allocation6], 128, 128, 8
        $region24: #{fused_mlp_forward.1} parent=11 // pred_fallthru
          _
        // Predicated region
        $region25: #{fused_mlp_forward.1} parent=11 // pred_check
          %p198 = pneg %p126
        $region26: #{fused_mlp_forward.1} parent=11 // pred_check_branch
          %200 = sbr.rel (%p198) target = $region28
        $region27: #{fused_mlp_forward.1} parent=11 // pred_region
          _
        $region28: #{fused_mlp_forward.1} parent=11 // pred_fallthru
          _
      $region12: #{fused_mlp_forward.1} parent=5 // pred_fallthru
        _
      %p201 = scmp.lt.s32.totalorder %s16, 2
      // Predicated region
      $region29: #{fused_mlp_forward.1} parent=5 // pred_check
        %p202 = pneg %p201
      $region30: #{fused_mlp_forward.1} parent=5 // pred_check_branch
        %204 = sbr.rel (%p202) target = $region32
      $region31: #{fused_mlp_forward.1} parent=5 // pred_region
        // Predicated region
        $region33: #{fused_mlp_forward.1} parent=31 // pred_check
          %p205 = pneg %p36
        $region34: #{fused_mlp_forward.1} parent=31 // pred_check_branch
          %207 = sbr.rel (%p205) target = $region36
        $region35: #{fused_mlp_forward.1} parent=31 // pred_region
          %p208 = scmp.lt.s32.totalorder %s16, 1
          %s209 = scalar_select %p208, %s16, 1
          %s210 = smul.addr %s209, 8
          %s211 = scalar_lea.vmem %s0, %s210
        $region36: #{fused_mlp_forward.1} parent=31 // pred_fallthru
          _
      $region32: #{fused_mlp_forward.1} parent=5 // pred_fallthru
        _
      %p212 = scmp.le.s32.totalorder 1, %s16
      %p213 = scmp.lt.s32.totalorder %s16, 3
      %p214 = pnand %p212, %p213
      %p215 = pneg %p214
      // Predicated region
      $region37: #{fused_mlp_forward.1} parent=5 // pred_check
        _
      $region38: #{fused_mlp_forward.1} parent=5 // pred_check_branch
        %217 = sbr.rel (%p214) target = $region40
      $region39: #{fused_mlp_forward.1} parent=5 // pred_region
        %s218 = ssub.s32 %s16, 1
        // Predicated region
        $region41: #{fused_mlp_forward.1} parent=39 // pred_check
          %p219 = pneg %p63
        $region42: #{fused_mlp_forward.1} parent=39 // pred_check_branch
          %221 = sbr.rel (%p219) target = $region44
        $region43: #{fused_mlp_forward.1} parent=39 // pred_region
          %223 = dma.done [#allocation3], 2048
        $region44: #{fused_mlp_forward.1} parent=39 // pred_fallthru
          _
        // Predicated region
        $region45: #{fused_mlp_forward.1} parent=39 // pred_check
          %p224 = pneg %p105
        $region46: #{fused_mlp_forward.1} parent=39 // pred_check_branch
          %226 = sbr.rel (%p224) target = $region48
        $region47: #{fused_mlp_forward.1} parent=39 // pred_region
          %228 = dma.done [#allocation6], 2048
        $region48: #{fused_mlp_forward.1} parent=39 // pred_fallthru
          _
        %p229 = scmp.lt.s32.totalorder %s21, 1
        %s230 = scalar_select %p229, %s21, 1
        %s231 = smul.addr %s230, 8
        %s232 = scalar_lea.vmem %s0, %s231
        %p233 = pneg %p42
        %p234 = pneg %p39
        %p235 = pneg %p63
        %p236 = pneg %p60
        %p237 = pneg %p84
        %p238 = pneg %p81
        %p239 = pneg %p105
        %p240 = pneg %p102
        %p241 = pneg %p126
        %p242 = pneg %p123
        %p243 = pneg %p152
        %p244 = pneg %p149
        %s245 = sand.u32 %s139, 1
        %s246 = scalar_lea.sflag [#allocation4], %s245
        %s247 = sand.u32 %s139, 1
        %s248 = smul.addr %s247, 8
        %s249 = scalar_lea.vmem [#allocation7], %s248
        %p250 = scmp.lt.s32.totalorder %s21, 1
        %s251 = scalar_select %p250, %s21, 1
        %s252 = smul.addr %s251, 8
        %s253 = scalar_lea.vmem %s0, %s252
        %v254 = vld [vmem:[%s253] sm:$0xff]
        %v255 = vld [vmem:[#allocation2] sm:$0xff]
        %v256 = vld [vmem:[#allocation2 + $0x8] sm:$0xff]
        %v257 = vld [vmem:[#allocation2 + $0x10] sm:$0xff]
        %v258 = vld [vmem:[#allocation2 + $0x18] sm:$0xff]
        %v259 = vld [vmem:[#allocation2 + $0x20] sm:$0xff]
        %v260 = vld [vmem:[#allocation2 + $0x28] sm:$0xff]
        %v261 = vld [vmem:[#allocation2 + $0x30] sm:$0xff]
        %v262 = vld [vmem:[#allocation2 + $0x38] sm:$0xff]
        %v263 = vld [vmem:[#allocation2 + $0x40] sm:$0xff]
        %v264 = vld [vmem:[#allocation2 + $0x48] sm:$0xff]
        %v265 = vld [vmem:[#allocation2 + $0x50] sm:$0xff]
        %v266 = vld [vmem:[#allocation2 + $0x58] sm:$0xff]
        %v267 = vld [vmem:[#allocation2 + $0x60] sm:$0xff]
        %v268 = vld [vmem:[#allocation2 + $0x68] sm:$0xff]
        %v269 = vld [vmem:[#allocation2 + $0x70] sm:$0xff]
        %v270 = vld [vmem:[#allocation2 + $0x78] sm:$0xff]
        %v271 = vld [vmem:[%s2] sm:$0x1]
        %v273 = vperm.slane %v271, 0
        %275 = vmatpush.msra.mxu0 %v270
        %276 = vmatpush.msra.mxu0 %v269
        %277 = vmatpush.msra.mxu0 %v268
        %278 = vmatpush.msra.mxu0 %v267
        %279 = vmatpush.msra.mxu0 %v266
        %280 = vmatpush.msra.mxu0 %v265
        %281 = vmatpush.msra.mxu0 %v264
        %282 = vmatpush.msra.mxu0 %v263
        %283 = vmatpush.msra.mxu0 %v262
        %284 = vmatpush.msra.mxu0 %v261
        %285 = vmatpush.msra.mxu0 %v260
        %286 = vmatpush.msra.mxu0 %v259
        %287 = vmatpush.msra.mxu0 %v258
        %288 = vmatpush.msra.mxu0 %v257
        %289 = vmatpush.msra.mxu0 %v256
        %290 = vmatpush.msra.mxu0 %v255
        %291 = vmatmul.f32.gmra.mxu0 %v254
        %v292 = vpop.f32.mrf.mxu0
        %v293 = vadd.f32 %v273, %v292
        %294 = vdwg.mxu0
        %v295 = vmax.f32 %v293, 0.0
        %v296 = vld [vmem:[#allocation5] sm:$0xff]
        %v297 = vld [vmem:[#allocation5 + $0x8] sm:$0xff]
        %v298 = vld [vmem:[#allocation5 + $0x10] sm:$0xff]
        %v299 = vld [vmem:[#allocation5 + $0x18] sm:$0xff]
        %v300 = vld [vmem:[#allocation5 + $0x20] sm:$0xff]
        %v301 = vld [vmem:[#allocation5 + $0x28] sm:$0xff]
        %v302 = vld [vmem:[#allocation5 + $0x30] sm:$0xff]
        %v303 = vld [vmem:[#allocation5 + $0x38] sm:$0xff]
        %v304 = vld [vmem:[#allocation5 + $0x40] sm:$0xff]
        %v305 = vld [vmem:[#allocation5 + $0x48] sm:$0xff]
        %v306 = vld [vmem:[#allocation5 + $0x50] sm:$0xff]
        %v307 = vld [vmem:[#allocation5 + $0x58] sm:$0xff]
        %v308 = vld [vmem:[#allocation5 + $0x60] sm:$0xff]
        %v309 = vld [vmem:[#allocation5 + $0x68] sm:$0xff]
        %v310 = vld [vmem:[#allocation5 + $0x70] sm:$0xff]
        %v311 = vld [vmem:[#allocation5 + $0x78] sm:$0xff]
        %v312 = vld [vmem:[%s4] sm:$0x1]
        %v314 = vperm.slane %v312, 0
        %316 = vmatpush.msra.mxu0 %v311
        %317 = vmatpush.msra.mxu0 %v310
        %318 = vmatpush.msra.mxu0 %v309
        %319 = vmatpush.msra.mxu0 %v308
        %320 = vmatpush.msra.mxu0 %v307
        %321 = vmatpush.msra.mxu0 %v306
        %322 = vmatpush.msra.mxu0 %v305
        %323 = vmatpush.msra.mxu0 %v304
        %324 = vmatpush.msra.mxu0 %v303
        %325 = vmatpush.msra.mxu0 %v302
        %326 = vmatpush.msra.mxu0 %v301
        %327 = vmatpush.msra.mxu0 %v300
        %328 = vmatpush.msra.mxu0 %v299
        %329 = vmatpush.msra.mxu0 %v298
        %330 = vmatpush.msra.mxu0 %v297
        %331 = vmatpush.msra.mxu0 %v296
        %332 = vmatmul.f32.gmra.mxu0 %v295
        %v333 = vpop.f32.mrf.mxu0
        %v334 = vadd.f32 %v314, %v333
        %335 = vdwg.mxu0
        %336 = vst [vmem:[%s249] sm:$0xff] %v334
        %s337 = sand.u32 %s139, 1
        %s338 = scalar_lea.sflag [#allocation4], %s337
        %s339 = sand.u32 %s139, 1
        %s340 = smul.addr %s339, 8
        %s341 = scalar_lea.vmem [#allocation7], %s340
        // Predicated region
        $region49: #{fused_mlp_forward.1} parent=39 // pred_check
          %p342 = pneg %p149
        $region50: #{fused_mlp_forward.1} parent=39 // pred_check_branch
          %344 = sbr.rel (%p342) target = $region52
        $region51: #{fused_mlp_forward.1} parent=39 // pred_region
          %346 = vsyncadd %s338, 0
          %s347 = smul.addr %s21, 8
          %s348 = scalar_lea.hbm %s5, %s347
          %s350 = sshll.u32 %s341, 4
          %s351 = int_to_ptr.vmem [resolvable:$true] %s350
          %s352 = sshll.u32 %s348, 4
          %s353 = int_to_ptr.hbm [resolvable:$true] %s352
          %355 = dma.vmem_to_hbm [thread:$0]  %s351, 128, %s353, %s338
        $region52: #{fused_mlp_forward.1} parent=39 // pred_fallthru
          _
      $region40: #{fused_mlp_forward.1} parent=5 // pred_fallthru
        _
      %p356 = scmp.le.s32.totalorder 2, %s16
      // Predicated region
      $region53: #{fused_mlp_forward.1} parent=5 // pred_check
        %p357 = pneg %p356
      $region54: #{fused_mlp_forward.1} parent=5 // pred_check_branch
        %359 = sbr.rel (%p357) target = $region56
      $region55: #{fused_mlp_forward.1} parent=5 // pred_region
        %s360 = ssub.s32 %s16, 2
        // Predicated region
        $region57: #{fused_mlp_forward.1} parent=55 // pred_check
          %p361 = pneg %p155
        $region58: #{fused_mlp_forward.1} parent=55 // pred_check_branch
          %363 = sbr.rel (%p361) target = $region60
        $region59: #{fused_mlp_forward.1} parent=55 // pred_region
          %s364 = sand.u32 %s140, 1
          %s365 = scalar_lea.sflag [#allocation4], %s364
          %s366 = sand.u32 %s140, 1
          %s367 = smul.addr %s366, 8
          %s368 = scalar_lea.vmem [#allocation7], %s367
          %370 = dma.done %s365, 128
        $region60: #{fused_mlp_forward.1} parent=55 // pred_fallthru
          _
      $region56: #{fused_mlp_forward.1} parent=5 // pred_fallthru
        _
    $region6: #{fused_mlp_forward.1} parent=1 // loop_footer
      %s20 = sadd.s32 1, %s16
    $region7: #{fused_mlp_forward.1} parent=1 // loop_footer_branch
      %15 = sbr.rel target = $region3
    $region8: #{fused_mlp_forward.1} parent=1 // loop_exit
      _
    %371 = vsyncpa [#allocation3], 1
    %s372 = scalar_lea.sflag [#allocation3], 1
    %373 = vsyncpa %s372, 1
    %374 = vsyncpa [#allocation6], 1
    %375 = vsyncpa [#allocation4], 1
    %s376 = scalar_lea.sflag [#allocation4], 1
    %377 = vsyncpa %s376, 1

// kernel: fused_mlp_forward.1
$region0: #{fused_mlp_forward.1}
  #allocation0 [shape = 'u32[]', space=smem, size = 0x4, offset = 0x4, fixed_abs, tag = 'smem constant byte address 0x4 - core index']
  #allocation1 [shape = 'u32[72,128]{1,0:T(1,128)}', space=vmem, size = 0x9000, scoped, tag = 'internal scratch']
  %s0 = inlined_call_operand.vmem [shape: f32[16,128], index: 0, kind: input, shape index: {}]
  %s1 = inlined_call_operand.hbm [shape: f32[128,128], index: 1, kind: input, shape index: {}]
  %s2 = inlined_call_operand.vmem [shape: f32[1,128], index: 2, kind: input, shape index: {}]
  %s3 = inlined_call_operand.hbm [shape: f32[128,128], index: 3, kind: input, shape index: {}]
  %s4 = inlined_call_operand.vmem [shape: f32[1,128], index: 4, kind: input, shape index: {}]
  %s5 = inlined_call_operand.hbm [shape: f32[16,128], index: 5, kind: output, shape index: {}]
  %s6 = sld [smem:[#allocation0]]
  $region61: #{fused_mlp_forward.1} parent=0
    _
  %s8 = ssub.s32 1, %s6
  %s9 = scalar_select 0, %s8, %s6
  $region1: #{fused_mlp_forward.1} parent=0
    #allocation2 [shape = 'u8[65536]{0}', space=vmem, size = 0x10000, scoped, tag = 'input window, operand 1, single buffered']
    #allocation3 [shape = 's32[2]{0}', space=sflag, size = 0x8, scoped, tag = 'scoped memory for fused_mlp_forward.1']
    #allocation4 [shape = 's32[2]{0}', space=sflag, size = 0x8, scoped, tag = 'scoped memory for fused_mlp_forward.1']
    #allocation5 [shape = 'u8[65536]{0}', space=vmem, size = 0x10000, scoped, tag = 'input window, operand 3, single buffered']
    #allocation6 [shape = 's32[1]{0}', space=sflag, size = 0x4, scoped, tag = 'scoped memory for fused_mlp_forward.1']
    #allocation7 [shape = 'u8[8192]{0}', space=vmem, size = 0x2000, scoped, tag = 'output window, operand 0']
    %10 = vsyncpa [#allocation3], 0
    %11 = vsyncpa [#allocation6], 0
    %12 = vsyncpa [#allocation4], 0
    %s13 = scalar_lea.sflag [#allocation4], 1
    %14 = vsyncpa %s13, 0
    loop: start=0, step=1, limit=4
    $region2: #{fused_mlp_forward.1} parent=1 // loop_pre_header
      _
    $region3: #{fused_mlp_forward.1} parent=1 // loop_header
      %s16 = sphi 0, %s20
      %p17 = scmp.ge.s32.totalorder %s16, 4
      %s26 = sphi 0, %s28
      %s29 = sphi 0, %s26
      %s30 = sphi 0, %s29
      %s46 = sphi 0, %s30
      %s50 = sphi 0, %s50
      %s52 = sphi 0, %s50
      %s53 = sphi 0, %s52
      %s67 = sphi 0, %s53
      %s71 = sphi 0, %s71
      %s73 = sphi 0, %s71
      %s74 = sphi 0, %s73
      %s88 = sphi 0, %s74
      %s92 = sphi 0, %s92
      %s94 = sphi 0, %s92
      %s95 = sphi 0, %s94
      %s109 = sphi 0, %s95
      %s113 = sphi 0, %s113
      %s115 = sphi 0, %s113
      %s116 = sphi 0, %s115
      %s130 = sphi 0, %s116
      %s136 = sphi 0, %s138
      %s139 = sphi 0, %s136
      %s140 = sphi 0, %s139
      %s156 = sphi 0, %s140
    $region4: #{fused_mlp_forward.1} parent=1 // loop_header_branch
      %19 = sbr.rel (%p17) target = $region8
    $region5: #{fused_mlp_forward.1} parent=1 // loop_body
      %s21 = ssub.s32 %s16, 1
      %s22 = ssub.s32 %s16, 2
      %s23 = sadd.s32 %s16, 1
      %s24 = ssub.s32 %s16, %s23
      %p25 = scmp.eq.s32.totalorder %s24, 0
      %s27 = sadd.s32 %s26, 1
      %s28 = scalar_select %p25, %s26, %s27
      %p31 = pneg %p25
      %p32 = scmp.eq.s32.totalorder %s16, 1
      %p33 = por %p31, %p32
      %p34 = scmp.ne.s32.totalorder %s26, %s29
      %p35 = scmp.eq.s32.totalorder %s16, 0
      %p36 = por %p34, %p35
      %p37 = scmp.ne.s32.totalorder %s26, %s29
      %p38 = scmp.eq.s32.totalorder %s21, 1
      %p39 = por %p37, %p38
      %p40 = scmp.ne.s32.totalorder %s29, %s30
      %p41 = scmp.eq.s32.totalorder %s21, 0
      %p42 = por %p40, %p41
      %p43 = scmp.ne.s32.totalorder %s29, %s30
      %p44 = scmp.eq.s32.totalorder %s22, 1
      %p45 = por %p43, %p44
      %p47 = scmp.ne.s32.totalorder %s30, %s46
      %p48 = scmp.eq.s32.totalorder %s22, 0
      %p49 = por %p47, %p48
      %s51 = sadd.s32 %s50, 1
      %p54 = scmp.eq.s32.totalorder %s16, 1
      %p55 = scmp.ne.s32.totalorder %s50, %s52
      %p56 = scmp.eq.s32.totalorder %s16, 0
      %p57 = por %p55, %p56
      %p58 = scmp.ne.s32.totalorder %s50, %s52
      %p59 = scmp.eq.s32.totalorder %s21, 1
      %p60 = por %p58, %p59
      %p61 = scmp.ne.s32.totalorder %s52, %s53
      %p62 = scmp.eq.s32.totalorder %s21, 0
      %p63 = por %p61, %p62
      %p64 = scmp.ne.s32.totalorder %s52, %s53
      %p65 = scmp.eq.s32.totalorder %s22, 1
      %p66 = por %p64, %p65
      %p68 = scmp.ne.s32.totalorder %s53, %s67
      %p69 = scmp.eq.s32.totalorder %s22, 0
      %p70 = por %p68, %p69
      %s72 = sadd.s32 %s71, 1
      %p75 = scmp.eq.s32.totalorder %s16, 1
      %p76 = scmp.ne.s32.totalorder %s71, %s73
      %p77 = scmp.eq.s32.totalorder %s16, 0
      %p78 = por %p76, %p77
      %p79 = scmp.ne.s32.totalorder %s71, %s73
      %p80 = scmp.eq.s32.totalorder %s21, 1
      %p81 = por %p79, %p80
      %p82 = scmp.ne.s32.totalorder %s73, %s74
      %p83 = scmp.eq.s32.totalorder %s21, 0
      %p84 = por %p82, %p83
      %p85 = scmp.ne.s32.totalorder %s73, %s74
      %p86 = scmp.eq.s32.totalorder %s22, 1
      %p87 = por %p85, %p86
      %p89 = scmp.ne.s32.totalorder %s74, %s88
      %p90 = scmp.eq.s32.totalorder %s22, 0
      %p91 = por %p89, %p90
      %s93 = sadd.s32 %s92, 1
      %p96 = scmp.eq.s32.totalorder %s16, 1
      %p97 = scmp.ne.s32.totalorder %s92, %s94
      %p98 = scmp.eq.s32.totalorder %s16, 0
      %p99 = por %p97, %p98
      %p100 = scmp.ne.s32.totalorder %s92, %s94
      %p101 = scmp.eq.s32.totalorder %s21, 1
      %p102 = por %p100, %p101
      %p103 = scmp.ne.s32.totalorder %s94, %s95
      %p104 = scmp.eq.s32.totalorder %s21, 0
      %p105 = por %p103, %p104
      %p106 = scmp.ne.s32.totalorder %s94, %s95
      %p107 = scmp.eq.s32.totalorder %s22, 1
      %p108 = por %p106, %p107
      %p110 = scmp.ne.s32.totalorder %s95, %s109
      %p111 = scmp.eq.s32.totalorder %s22, 0
      %p112 = por %p110, %p111
      %s114 = sadd.s32 %s113, 1
      %p117 = scmp.eq.s32.totalorder %s16, 1
      %p118 = scmp.ne.s32.totalorder %s113, %s115
      %p119 = scmp.eq.s32.totalorder %s16, 0
      %p120 = por %p118, %p119
      %p121 = scmp.ne.s32.totalorder %s113, %s115
      %p122 = scmp.eq.s32.totalorder %s21, 1
      %p123 = por %p121, %p122
      %p124 = scmp.ne.s32.totalorder %s115, %s116
      %p125 = scmp.eq.s32.totalorder %s21, 0
      %p126 = por %p124, %p125
      %p127 = scmp.ne.s32.totalorder %s115, %s116
      %p128 = scmp.eq.s32.totalorder %s22, 1
      %p129 = por %p127, %p128
      %p131 = scmp.ne.s32.totalorder %s116, %s130
      %p132 = scmp.eq.s32.totalorder %s22, 0
      %p133 = por %p131, %p132
      %s134 = ssub.s32 %s16, %s23
      %p135 = scmp.eq.s32.totalorder %s134, 0
      %s137 = sadd.s32 %s136, 1
      %s138 = scalar_select %p135, %s136, %s137
      %p141 = pneg %p135
      %p142 = scmp.eq.s32.totalorder %s16, 1
      %p143 = por %p141, %p142
      %p144 = scmp.ne.s32.totalorder %s136, %s139
      %p145 = scmp.eq.s32.totalorder %s16, 0
      %p146 = por %p144, %p145
      %p147 = scmp.ne.s32.totalorder %s136, %s139
      %p148 = scmp.eq.s32.totalorder %s21, 1
      %p149 = por %p147, %p148
      %p150 = scmp.ne.s32.totalorder %s139, %s140
      %p151 = scmp.eq.s32.totalorder %s21, 0
      %p152 = por %p150, %p151
      %p153 = scmp.ne.s32.totalorder %s139, %s140
      %p154 = scmp.eq.s32.totalorder %s22, 1
      %p155 = por %p153, %p154
      %p157 = scmp.ne.s32.totalorder %s140, %s156
      %p158 = scmp.eq.s32.totalorder %s22, 0
      %p159 = por %p157, %p158
      %p160 = scmp.le.s32.totalorder 1, %s16
      %p161 = scmp.lt.s32.totalorder %s16, 3
      %p162 = pnand %p160, %p161
      %p163 = pneg %p162
      // Predicated region
      $region9: #{fused_mlp_forward.1} parent=5 // pred_check
        _
      $region10: #{fused_mlp_forward.1} parent=5 // pred_check_branch
        %165 = sbr.rel (%p162) target = $region12
      $region11: #{fused_mlp_forward.1} parent=5 // pred_region
        %s166 = ssub.s32 %s16, 1
        // Predicated region
        $region13: #{fused_mlp_forward.1} parent=11 // pred_check
          %p167 = pneg %p63
        $region14: #{fused_mlp_forward.1} parent=11 // pred_check_branch
          %169 = sbr.rel (%p167) target = $region16
        $region15: #{fused_mlp_forward.1} parent=11 // pred_region
          %171 = vsyncadd [#allocation3], 0
          %s172 = sshll.u32 %s1, 4
          %s173 = int_to_ptr.hbm [resolvable:$true] %s172
          %s174 = sshll.u32 [#allocation2], 4
          %s175 = int_to_ptr.vmem [resolvable:$true] %s174
          %180 = dma.hbm_to_vmem [thread:$0]  %s173, 2048, %s175, [#allocation3], 128, 128, 8
        $region16: #{fused_mlp_forward.1} parent=11 // pred_fallthru
          _
        // Predicated region
        $region17: #{fused_mlp_forward.1} parent=11 // pred_check
          %p181 = pneg %p84
        $region18: #{fused_mlp_forward.1} parent=11 // pred_check_branch
          %183 = sbr.rel (%p181) target = $region20
        $region19: #{fused_mlp_forward.1} parent=11 // pred_region
          _
        $region20: #{fused_mlp_forward.1} parent=11 // pred_fallthru
          _
        // Predicated region
        $region21: #{fused_mlp_forward.1} parent=11 // pred_check
          %p184 = pneg %p105
        $region22: #{fused_mlp_forward.1} parent=11 // pred_check_branch
          %186 = sbr.rel (%p184) target = $region24
        $region23: #{fused_mlp_forward.1} parent=11 // pred_region
          %188 = vsyncadd [#allocation6], 0
          %s189 = sshll.u32 %s3, 4
          %s190 = int_to_ptr.hbm [resolvable:$true] %s189
          %s191 = sshll.u32 [#allocation5], 4
          %s192 = int_to_ptr.vmem [resolvable:$true] %s191
          %197 = dma.hbm_to_vmem [thread:$0]  %s190, 2048, %s192, [#allocation6], 128, 128, 8
        $region24: #{fused_mlp_forward.1} parent=11 // pred_fallthru
          _
        // Predicated region
        $region25: #{fused_mlp_forward.1} parent=11 // pred_check
          %p198 = pneg %p126
        $region26: #{fused_mlp_forward.1} parent=11 // pred_check_branch
          %200 = sbr.rel (%p198) target = $region28
        $region27: #{fused_mlp_forward.1} parent=11 // pred_region
          _
        $region28: #{fused_mlp_forward.1} parent=11 // pred_fallthru
          _
      $region12: #{fused_mlp_forward.1} parent=5 // pred_fallthru
        _
      %p201 = scmp.lt.s32.totalorder %s16, 2
      // Predicated region
      $region29: #{fused_mlp_forward.1} parent=5 // pred_check
        %p202 = pneg %p201
      $region30: #{fused_mlp_forward.1} parent=5 // pred_check_branch
        %204 = sbr.rel (%p202) target = $region32
      $region31: #{fused_mlp_forward.1} parent=5 // pred_region
        // Predicated region
        $region33: #{fused_mlp_forward.1} parent=31 // pred_check
          %p205 = pneg %p36
        $region34: #{fused_mlp_forward.1} parent=31 // pred_check_branch
          %207 = sbr.rel (%p205) target = $region36
        $region35: #{fused_mlp_forward.1} parent=31 // pred_region
          %p208 = scmp.lt.s32.totalorder %s16, 1
          %s209 = scalar_select %p208, %s16, 1
          %s210 = smul.addr %s209, 8
          %s211 = scalar_lea.vmem %s0, %s210
        $region36: #{fused_mlp_forward.1} parent=31 // pred_fallthru
          _
      $region32: #{fused_mlp_forward.1} parent=5 // pred_fallthru
        _
      %p212 = scmp.le.s32.totalorder 1, %s16
      %p213 = scmp.lt.s32.totalorder %s16, 3
      %p214 = pnand %p212, %p213
      %p215 = pneg %p214
      // Predicated region
      $region37: #{fused_mlp_forward.1} parent=5 // pred_check
        _
      $region38: #{fused_mlp_forward.1} parent=5 // pred_check_branch
        %217 = sbr.rel (%p214) target = $region40
      $region39: #{fused_mlp_forward.1} parent=5 // pred_region
        %s218 = ssub.s32 %s16, 1
        // Predicated region
        $region41: #{fused_mlp_forward.1} parent=39 // pred_check
          %p219 = pneg %p63
        $region42: #{fused_mlp_forward.1} parent=39 // pred_check_branch
          %221 = sbr.rel (%p219) target = $region44
        $region43: #{fused_mlp_forward.1} parent=39 // pred_region
          %223 = dma.done [#allocation3], 2048
        $region44: #{fused_mlp_forward.1} parent=39 // pred_fallthru
          _
        // Predicated region
        $region45: #{fused_mlp_forward.1} parent=39 // pred_check
          %p224 = pneg %p105
        $region46: #{fused_mlp_forward.1} parent=39 // pred_check_branch
          %226 = sbr.rel (%p224) target = $region48
        $region47: #{fused_mlp_forward.1} parent=39 // pred_region
          %228 = dma.done [#allocation6], 2048
        $region48: #{fused_mlp_forward.1} parent=39 // pred_fallthru
          _
        %p229 = scmp.lt.s32.totalorder %s21, 1
        %s230 = scalar_select %p229, %s21, 1
        %s231 = smul.addr %s230, 8
        %s232 = scalar_lea.vmem %s0, %s231
        %p233 = pneg %p42
        %p234 = pneg %p39
        %p235 = pneg %p63
        %p236 = pneg %p60
        %p237 = pneg %p84
        %p238 = pneg %p81
        %p239 = pneg %p105
        %p240 = pneg %p102
        %p241 = pneg %p126
        %p242 = pneg %p123
        %p243 = pneg %p152
        %p244 = pneg %p149
        %s245 = sand.u32 %s139, 1
        %s246 = scalar_lea.sflag [#allocation4], %s245
        %s247 = sand.u32 %s139, 1
        %s248 = smul.addr %s247, 8
        %s249 = scalar_lea.vmem [#allocation7], %s248
        %p250 = scmp.lt.s32.totalorder %s21, 1
        %s251 = scalar_select %p250, %s21, 1
        %s252 = smul.addr %s251, 8
        %s253 = scalar_lea.vmem %s0, %s252
        %v254 = vld [vmem:[%s253] sm:$0xff]
        %v255 = vld [vmem:[#allocation2] sm:$0xff]
        %v256 = vld [vmem:[#allocation2 + $0x8] sm:$0xff]
        %v257 = vld [vmem:[#allocation2 + $0x10] sm:$0xff]
        %v258 = vld [vmem:[#allocation2 + $0x18] sm:$0xff]
        %v259 = vld [vmem:[#allocation2 + $0x20] sm:$0xff]
        %v260 = vld [vmem:[#allocation2 + $0x28] sm:$0xff]
        %v261 = vld [vmem:[#allocation2 + $0x30] sm:$0xff]
        %v262 = vld [vmem:[#allocation2 + $0x38] sm:$0xff]
        %v263 = vld [vmem:[#allocation2 + $0x40] sm:$0xff]
        %v264 = vld [vmem:[#allocation2 + $0x48] sm:$0xff]
        %v265 = vld [vmem:[#allocation2 + $0x50] sm:$0xff]
        %v266 = vld [vmem:[#allocation2 + $0x58] sm:$0xff]
        %v267 = vld [vmem:[#allocation2 + $0x60] sm:$0xff]
        %v268 = vld [vmem:[#allocation2 + $0x68] sm:$0xff]
        %v269 = vld [vmem:[#allocation2 + $0x70] sm:$0xff]
        %v270 = vld [vmem:[#allocation2 + $0x78] sm:$0xff]
        %v271 = vld [vmem:[%s2] sm:$0x1]
        %v273 = vperm.slane %v271, 0
        %275 = vmatpush.msra.mxu0 %v270
        %276 = vmatpush.msra.mxu0 %v269
        %277 = vmatpush.msra.mxu0 %v268
        %278 = vmatpush.msra.mxu0 %v267
        %279 = vmatpush.msra.mxu0 %v266
        %280 = vmatpush.msra.mxu0 %v265
        %281 = vmatpush.msra.mxu0 %v264
        %282 = vmatpush.msra.mxu0 %v263
        %283 = vmatpush.msra.mxu0 %v262
        %284 = vmatpush.msra.mxu0 %v261
        %285 = vmatpush.msra.mxu0 %v260
        %286 = vmatpush.msra.mxu0 %v259
        %287 = vmatpush.msra.mxu0 %v258
        %288 = vmatpush.msra.mxu0 %v257
        %289 = vmatpush.msra.mxu0 %v256
        %290 = vmatpush.msra.mxu0 %v255
        %291 = vmatmul.f32.gmra.mxu0 %v254
        %v292 = vpop.f32.mrf.mxu0
        %v293 = vadd.f32 %v273, %v292
        %294 = vdwg.mxu0
        %v295 = vmax.f32 %v293, 0.0
        %v296 = vld [vmem:[#allocation5] sm:$0xff]
        %v297 = vld [vmem:[#allocation5 + $0x8] sm:$0xff]
        %v298 = vld [vmem:[#allocation5 + $0x10] sm:$0xff]
        %v299 = vld [vmem:[#allocation5 + $0x18] sm:$0xff]
        %v300 = vld [vmem:[#allocation5 + $0x20] sm:$0xff]
        %v301 = vld [vmem:[#allocation5 + $0x28] sm:$0xff]
        %v302 = vld [vmem:[#allocation5 + $0x30] sm:$0xff]
        %v303 = vld [vmem:[#allocation5 + $0x38] sm:$0xff]
        %v304 = vld [vmem:[#allocation5 + $0x40] sm:$0xff]
        %v305 = vld [vmem:[#allocation5 + $0x48] sm:$0xff]
        %v306 = vld [vmem:[#allocation5 + $0x50] sm:$0xff]
        %v307 = vld [vmem:[#allocation5 + $0x58] sm:$0xff]
        %v308 = vld [vmem:[#allocation5 + $0x60] sm:$0xff]
        %v309 = vld [vmem:[#allocation5 + $0x68] sm:$0xff]
        %v310 = vld [vmem:[#allocation5 + $0x70] sm:$0xff]
        %v311 = vld [vmem:[#allocation5 + $0x78] sm:$0xff]
        %v312 = vld [vmem:[%s4] sm:$0x1]
        %v314 = vperm.slane %v312, 0
        %316 = vmatpush.msra.mxu0 %v311
        %317 = vmatpush.msra.mxu0 %v310
        %318 = vmatpush.msra.mxu0 %v309
        %319 = vmatpush.msra.mxu0 %v308
        %320 = vmatpush.msra.mxu0 %v307
        %321 = vmatpush.msra.mxu0 %v306
        %322 = vmatpush.msra.mxu0 %v305
        %323 = vmatpush.msra.mxu0 %v304
        %324 = vmatpush.msra.mxu0 %v303
        %325 = vmatpush.msra.mxu0 %v302
        %326 = vmatpush.msra.mxu0 %v301
        %327 = vmatpush.msra.mxu0 %v300
        %328 = vmatpush.msra.mxu0 %v299
        %329 = vmatpush.msra.mxu0 %v298
        %330 = vmatpush.msra.mxu0 %v297
        %331 = vmatpush.msra.mxu0 %v296
        %332 = vmatmul.f32.gmra.mxu0 %v295
        %v333 = vpop.f32.mrf.mxu0
        %v334 = vadd.f32 %v314, %v333
        %335 = vdwg.mxu0
        %336 = vst [vmem:[%s249] sm:$0xff] %v334
        %s337 = sand.u32 %s139, 1
        %s338 = scalar_lea.sflag [#allocation4], %s337
        %s339 = sand.u32 %s139, 1
        %s340 = smul.addr %s339, 8
        %s341 = scalar_lea.vmem [#allocation7], %s340
        // Predicated region
        $region49: #{fused_mlp_forward.1} parent=39 // pred_check
          %p342 = pneg %p149
        $region50: #{fused_mlp_forward.1} parent=39 // pred_check_branch
          %344 = sbr.rel (%p342) target = $region52
        $region51: #{fused_mlp_forward.1} parent=39 // pred_region
          %346 = vsyncadd %s338, 0
          %s347 = smul.addr %s21, 8
          %s348 = scalar_lea.hbm %s5, %s347
          %s350 = sshll.u32 %s341, 4
          %s351 = int_to_ptr.vmem [resolvable:$true] %s350
          %s352 = sshll.u32 %s348, 4
          %s353 = int_to_ptr.hbm [resolvable:$true] %s352
          %355 = dma.vmem_to_hbm [thread:$0]  %s351, 128, %s353, %s338
        $region52: #{fused_mlp_forward.1} parent=39 // pred_fallthru
          _
      $region40: #{fused_mlp_forward.1} parent=5 // pred_fallthru
        _
      %p356 = scmp.le.s32.totalorder 2, %s16
      // Predicated region
      $region53: #{fused_mlp_forward.1} parent=5 // pred_check
        %p357 = pneg %p356
      $region54: #{fused_mlp_forward.1} parent=5 // pred_check_branch
        %359 = sbr.rel (%p357) target = $region56
      $region55: #{fused_mlp_forward.1} parent=5 // pred_region
        %s360 = ssub.s32 %s16, 2
        // Predicated region
        $region57: #{fused_mlp_forward.1} parent=55 // pred_check
          %p361 = pneg %p155
        $region58: #{fused_mlp_forward.1} parent=55 // pred_check_branch
          %363 = sbr.rel (%p361) target = $region60
        $region59: #{fused_mlp_forward.1} parent=55 // pred_region
          %s364 = sand.u32 %s140, 1
          %s365 = scalar_lea.sflag [#allocation4], %s364
          %s366 = sand.u32 %s140, 1
          %s367 = smul.addr %s366, 8
          %s368 = scalar_lea.vmem [#allocation7], %s367
          %370 = dma.done %s365, 128
        $region60: #{fused_mlp_forward.1} parent=55 // pred_fallthru
          _
      $region56: #{fused_mlp_forward.1} parent=5 // pred_fallthru
        _
    $region6: #{fused_mlp_forward.1} parent=1 // loop_footer
      %s20 = sadd.s32 1, %s16
    $region7: #{fused_mlp_forward.1} parent=1 // loop_footer_branch
      %15 = sbr.rel target = $region3
    $region8: #{fused_mlp_forward.1} parent=1 // loop_exit
      _
    %371 = vsyncpa [#allocation3], 1
    %s372 = scalar_lea.sflag [#allocation3], 1
    %373 = vsyncpa %s372, 1
    %374 = vsyncpa [#allocation6], 1
    %375 = vsyncpa [#allocation4], 1
    %s376 = scalar_lea.sflag [#allocation4], 1
    %377 = vsyncpa %s376, 1

</llo_original>
